<compile_context>
chip_gen: v7x
topology: tpu7x:2x2x1
jax: 0.10.0
libtpu: 0.0.40
codegen_flags: <defaults>
</compile_context>

<pallas_src>
import jax
import jax.numpy as jnp
from jax import lax
from jax.experimental import pallas as pl
from jax.experimental.pallas import tpu as pltpu

_LANE = 128
_SUBLANE = 8


def _cdiv(a, b):
    return (a + b - 1) // b


def _round_up(x, m):
    return _cdiv(x, m) * m


def _vmem_params():
    """Returns (double-buffered block budget, scoped-VMEM limit), per generation."""
    cap = None
    try:
        cap = getattr(pltpu.get_tpu_info(), "vmem_capacity_bytes", None)
    except Exception:
        cap = None
    if cap is None:
        return 12 * 1024 * 1024, 32 * 1024 * 1024       # unknown: conservative
    if cap <= 96 * 1024 * 1024:                          # v7x-class: 64 MiB / TC
        return 24 * 1024 * 1024, 48 * 1024 * 1024
    return 32 * 1024 * 1024, 64 * 1024 * 1024            # v5e / v6e: 128 MiB


# ---------------------------------------------------------------------------
# Kernels
# ---------------------------------------------------------------------------

def _mm_kernel(q_ref, k_ref, o_ref):
    # q: (mt, D), k: (xt, D), o: (mt, xt); contraction over the full D.
    o_ref[...] = lax.dot_general(
        q_ref[...], k_ref[...],
        dimension_numbers=(((1,), (1,)), ((), ())),
        preferred_element_type=jnp.float32,
    ).astype(o_ref.dtype)


def _bmm_kernel(q_ref, k_ref, o_ref):
    # q: (bt, rt, D), k: (bt, xt, D), o: (bt, rt, xt)
    o_ref[...] = lax.dot_general(
        q_ref[...], k_ref[...],
        dimension_numbers=(((2,), (2,)), ((0,), (0,))),
        preferred_element_type=jnp.float32,
    ).astype(o_ref.dtype)


def _matvec_kernel(q_ref, k_ref, o_ref):
    # q: (bt, D), k: (bt, xt, D), o: (bt, xt).
    # VPU broadcast-multiply + lane reduce over D: avoids bt separate M=1 MXU
    # matvecs and keeps the (bt, xt) output face sublane/lane dense.
    q = q_ref[...].astype(jnp.float32)
    k = k_ref[...].astype(jnp.float32)
    o_ref[...] = jnp.sum(k * q[:, None, :], axis=-1).astype(o_ref.dtype)


# ---------------------------------------------------------------------------
# pallas_call wrappers
# ---------------------------------------------------------------------------

def _mm(query, items2d):
    """query (Nq, D), items2d (X, D) -> (Nq, X)."""
    Nq, D = query.shape
    X = items2d.shape[0]
    itemsize = jnp.dtype(query.dtype).itemsize
    budget, limit = _vmem_params()

    De = _round_up(D, _LANE)            # minor dim pads to 128 lanes in VMEM
    m_cap = _round_up(Nq, _SUBLANE)
    x_cap = _round_up(X, _LANE)

    def _pick():
        for xt_c in (2048, 1024, 512, 256, 128):
            xt_c = min(xt_c, x_cap)
            for mt_c in (1024, 512, 256, 128, 64, 32, 16, 8):
                mt_c = min(mt_c, m_cap)
                need = 2 * itemsize * (mt_c * De + xt_c * De + mt_c * xt_c)
                if need <= budget:
                    return mt_c, xt_c
        return _SUBLANE, min(_LANE, x_cap)

    mt, xt = _pick()

    # v7x megacore: guarantee >=2 parallel grid steps when possible.
    if _cdiv(Nq, mt) * _cdiv(X, xt) < 2:
        if X > _LANE:
            xt = _round_up(_cdiv(X, 2), _LANE)
        elif Nq > _SUBLANE:
            mt = _round_up(_cdiv(Nq, 2), _SUBLANE)

    grid = (_cdiv(X, xt), _cdiv(Nq, mt))   # M innermost: each items tile read once
    return pl.pallas_call(
        _mm_kernel,
        out_shape=jax.ShapeDtypeStruct((Nq, X), query.dtype),
        grid=grid,
        in_specs=[
            pl.BlockSpec((mt, D), lambda j, i: (i, 0)),
            pl.BlockSpec((xt, D), lambda j, i: (j, 0)),
        ],
        out_specs=pl.BlockSpec((mt, xt), lambda j, i: (i, j)),
        compiler_params=pltpu.CompilerParams(
            dimension_semantics=("parallel", "parallel"),
            vmem_limit_bytes=limit),
    )(query, items2d)


def _bmm(q_b, items):
    """q_b (B, r, D), items (B, X, D) -> (B, r, X)."""
    B, r, D = q_b.shape
    X = items.shape[1]
    itemsize = jnp.dtype(q_b.dtype).itemsize
    budget, limit = _vmem_params()

    De = _round_up(D, _LANE)
    x_cap = _round_up(X, _LANE)
    # rt: full r when small (block dim == full dim is always layout-legal);
    # otherwise a multiple of 8 so the (rt, xt) store faces stay sublane dense.
    rt_cands = (r,) if r <= 32 else (32, 16, 8)

    def _pick():
        for rt_c in rt_cands:
            for bt_c in (64, 32, 16, 8, 4, 2, 1):
                bt_c = min(bt_c, B)
                for xt_c in (2048, 1024, 512, 256, 128):
                    xt_c = min(xt_c, x_cap)
                    need = 2 * itemsize * (
                        bt_c * rt_c * De + bt_c * xt_c * De + bt_c * rt_c * xt_c)
                    if need <= budget:
                        return bt_c, rt_c, xt_c
        return 1, rt_cands[-1], min(_LANE, x_cap)

    bt, rt, xt = _pick()

    if _cdiv(B, bt) * _cdiv(X, xt) * _cdiv(r, rt) < 2:
        if X > _LANE:
            xt = _round_up(_cdiv(X, 2), _LANE)
        elif B > 1:
            bt = _cdiv(B, 2)

    # r innermost: the items block index is constant across it, so items are
    # DMA'd from HBM exactly once; the (small) q tile is re-read per X tile.
    grid = (_cdiv(B, bt), _cdiv(X, xt), _cdiv(r, rt))
    return pl.pallas_call(
        _bmm_kernel,
        out_shape=jax.ShapeDtypeStruct((B, r, X), q_b.dtype),
        grid=grid,
        in_specs=[
            pl.BlockSpec((bt, rt, D), lambda b, x, rr: (b, rr, 0)),
            pl.BlockSpec((bt, xt, D), lambda b, x, rr: (b, x, 0)),
        ],
        out_specs=pl.BlockSpec((bt, rt, xt), lambda b, x, rr: (b, rr, x)),
        compiler_params=pltpu.CompilerParams(
            dimension_semantics=("parallel", "parallel", "parallel"),
            vmem_limit_bytes=limit),
    )(q_b, items)


def _matvec(query, items):
    """query (B, D), items (B, X, D) -> (B, X) (row-wise dot, r == 1 branch)."""
    B, D = query.shape
    X = items.shape[1]
    itemsize = jnp.dtype(query.dtype).itemsize
    budget, limit = _vmem_params()

    De = _round_up(D, _LANE)
    x_cap = _round_up(X, _LANE)
    b_cap = B if B < _SUBLANE else _round_up(B, _SUBLANE)

    def _pick():
        for bt_c in (64, 32, 16, 8):
            bt_c = min(bt_c, b_cap)
            for xt_c in (2048, 1024, 512, 256, 128):
                xt_c = min(xt_c, x_cap)
                need = 2 * itemsize * (bt_c * De + bt_c * xt_c * De + bt_c * xt_c)
                if need <= budget:
                    return bt_c, xt_c
        return min(_SUBLANE, b_cap), min(_LANE, x_cap)

    bt, xt = _pick()

    if _cdiv(B, bt) * _cdiv(X, xt) < 2:
        if X > _LANE:
            xt = _round_up(_cdiv(X, 2), _LANE)
        elif B > _SUBLANE:
            bt = _round_up(_cdiv(B, 2), _SUBLANE)

    grid = (_cdiv(B, bt), _cdiv(X, xt))    # X innermost: q tile stays resident
    return pl.pallas_call(
        _matvec_kernel,
        out_shape=jax.ShapeDtypeStruct((B, X), query.dtype),
        grid=grid,
        in_specs=[
            pl.BlockSpec((bt, D), lambda b, x: (b, 0)),
            pl.BlockSpec((bt, xt, D), lambda b, x: (b, x, 0)),
        ],
        out_specs=pl.BlockSpec((bt, xt), lambda b, x: (b, x)),
        compiler_params=pltpu.CompilerParams(
            dimension_semantics=("parallel", "parallel"),
            vmem_limit_bytes=limit),
    )(query, items)


# ---------------------------------------------------------------------------
# Module forward
# ---------------------------------------------------------------------------

def dot_product_similarity(query_embeddings, item_embeddings):
    """Mirrors DotProductSimilarity.forward.

    query_embeddings: (B, D) or (B*r, D) float
    item_embeddings:  (1, X, D) or (B, X, D) float
    returns: (B, X) or (B*r, X) float
    """
    B_I, X, D = item_embeddings.shape
    Nq = query_embeddings.shape[0]

    if B_I == 1:
        # torch.mm(query, items.squeeze(0).t()) -> (Nq, X)
        return _mm(query_embeddings, item_embeddings.reshape(X, D))
    elif Nq != B_I:
        # bmm(query.view(B, r, D), items^T).view(-1, X) -> (B*r, X)
        assert Nq % B_I == 0, (
            f"query rows ({Nq}) must be a multiple of item batch ({B_I})")
        q_b = query_embeddings.reshape(B_I, Nq // B_I, D)
        return _bmm(q_b, item_embeddings).reshape(-1, X)   # contiguous -> free
    else:
        # bmm(items, query.unsqueeze(2)).squeeze(2) -> (B, X)
        return _matvec(query_embeddings, item_embeddings)


if __name__ == "__main__":
    key = jax.random.PRNGKey(0)
    k1, k2, k3, k4, k5, k6 = jax.random.split(key, 6)

    D = 32

    # Case 1: item batch == 1 (mm branch); Nq/X not tile-aligned (ragged edges).
    Nq, X1 = 10, 200
    q1 = jax.random.normal(k1, (Nq, D), dtype=jnp.float32)
    i1 = jax.random.normal(k2, (1, X1, D), dtype=jnp.float32)
    out1 = jax.block_until_ready(dot_product_similarity(q1, i1))
    ref1 = q1 @ i1[0].T
    assert out1.shape == (Nq, X1)
    assert jnp.allclose(out1, ref1, atol=1e-4, rtol=1e-4)

    # Case 2: query rows = B * r (bmm branch).
    B, r, X2 = 2, 4, 16
    q2 = jax.random.normal(k3, (B * r, D), dtype=jnp.float32)
    i2 = jax.random.normal(k4, (B, X2, D), dtype=jnp.float32)
    out2 = jax.block_until_ready(dot_product_similarity(q2, i2))
    ref2 = jnp.einsum("brd,bxd->brx", q2.reshape(B, r, D), i2).reshape(-1, X2)
    assert out2.shape == (B * r, X2)
    assert jnp.allclose(out2, ref2, atol=1e-4, rtol=1e-4)

    # Case 3: query rows == item batch (r == 1 branch, VPU matvec kernel).
    q3 = jax.random.normal(k5, (B, D), dtype=jnp.float32)
    out3 = jax.block_until_ready(dot_product_similarity(q3, i2))
    ref3 = jnp.einsum("bd,bxd->bx", q3, i2)
    assert out3.shape == (B, X2)
    assert jnp.allclose(out3, ref3, atol=1e-4, rtol=1e-4)

    # Case 4: bmm branch with prime B=3 and non-128-aligned X (ragged B and X).
    B4, r4, X4, D4 = 3, 2, 200, 64
    q4 = jax.random.normal(k6, (B4 * r4, D4), dtype=jnp.float32)
    i4 = jax.random.normal(k1, (B4, X4, D4), dtype=jnp.float32)
    out4 = jax.block_until_ready(dot_product_similarity(q4, i4))
    ref4 = jnp.einsum("brd,bxd->brx", q4.reshape(B4, r4, D4), i4).reshape(-1, X4)
    assert out4.shape == (B4 * r4, X4)
    assert jnp.allclose(out4, ref4, atol=1e-4, rtol=1e-4)

    print("KERNEL_OK")
</pallas_src>

<mosaic_0001>
module attributes {stable_mosaic.version = 11 : i64} {
  func.func @_mm_kernel(%arg0: i32, %arg1: i32, %arg2: memref<16x32xf32, #tpu.memory_space<vmem>>, %arg3: memref<128x32xf32, #tpu.memory_space<vmem>>, %arg4: memref<16x128xf32, #tpu.memory_space<vmem>>) attributes {dimension_semantics = [#tpu.dimension_semantics<parallel>, #tpu.dimension_semantics<parallel>], iteration_bounds = array<i64: 2, 1>, scalar_prefetch = 0 : i64, scratch_operands = 0 : i64, tpu.core_type = #tpu.core_type<tc>, window_params = [{transform_indices = @transform_0, window_bounds = array<i64: 16, 32>}, {transform_indices = @transform_1, window_bounds = array<i64: 128, 32>}, {transform_indices = @transform_2, window_bounds = array<i64: 16, 128>}]} {
    %c0 = arith.constant 0 : index
    %c0_0 = arith.constant 0 : index
    %0 = vector.load %arg2[%c0, %c0_0] : memref<16x32xf32, #tpu.memory_space<vmem>>, vector<16x32xf32>
    %c0_1 = arith.constant 0 : index
    %c0_2 = arith.constant 0 : index
    %1 = vector.load %arg3[%c0_1, %c0_2] : memref<128x32xf32, #tpu.memory_space<vmem>>, vector<128x32xf32>
    %cst = arith.constant dense<0.000000e+00> : vector<16x128xf32>
    %2 = tpu.matmul %0, %1, %cst {dimension_numbers = #tpu.dot_dimension_numbers<[1], [1], [0], [0], [0, 0, 1, 0], [], []>} : vector<16x32xf32>, vector<128x32xf32>, vector<16x128xf32> -> vector<16x128xf32>
    %c0_3 = arith.constant 0 : index
    %c0_4 = arith.constant 0 : index
    %3 = vector.load %arg4[%c0_3, %c0_4] : memref<16x128xf32, #tpu.memory_space<vmem>>, vector<16x128xf32>
    tpu.vector_store %arg4[%c0_3, %c0_4], %2 {strides = array<i32>} : memref<16x128xf32, #tpu.memory_space<vmem>>, vector<16x128xf32>,
    return
  }
  func.func @transform_0(%arg0: i32, %arg1: i32) -> (i32, i32) {
    %c0_i32 = arith.constant 0 : i32
    %c0_i32_0 = arith.constant 0 : i32
    return %arg1, %c0_i32 : i32, i32
  }
  func.func @transform_1(%arg0: i32, %arg1: i32) -> (i32, i32) {
    %c0_i32 = arith.constant 0 : i32
    %c0_i32_0 = arith.constant 0 : i32
    return %arg0, %c0_i32 : i32, i32
  }
  func.func @transform_2(%arg0: i32, %arg1: i32) -> (i32, i32) {
    %c0_i32 = arith.constant 0 : i32
    return %arg1, %arg0 : i32, i32
  }
}

</mosaic_0001>

<llo_original>
// kernel: tpu_custom_call.1
$region0: #{tpu_custom_call.1}
  #allocation0 [shape = 'u32[]', space=smem, size = 0x4, offset = 0x4, fixed_abs, tag = 'smem constant byte address 0x4 - core index']
  #allocation1 [shape = 'u32[144,128]{1,0:T(1,128)}', space=vmem, size = 0x12000, scoped, tag = 'internal scratch']
  %s0 = inlined_call_operand.vmem [shape: f32[10,32], index: 0, kind: input, shape index: {}]
  %s1 = inlined_call_operand.vmem [shape: f32[200,32], index: 1, kind: input, shape index: {}]
  %s2 = inlined_call_operand.hbm [shape: f32[10,200], index: 2, kind: output, shape index: {}]
  %s3 = sld [smem:[#allocation0]]
  $region41: #{tpu_custom_call.1} parent=0
    _
  %s5 = ssub.s32 1, %s3
  %s6 = scalar_select 0, %s5, %s3
  $region1: #{tpu_custom_call.1} parent=0
    #allocation2 [shape = 'u8[16384]{0}', space=vmem, size = 0x4000, scoped, tag = 'output window, operand 0']
    #allocation3 [shape = 's32[2]{0}', space=sflag, size = 0x8, scoped, tag = 'scoped memory for tpu_custom_call.1']
    %7 = vsyncpa [#allocation3], 0
    %s8 = scalar_lea.sflag [#allocation3], 1
    %9 = vsyncpa %s8, 0
    loop: start=0, step=1, limit=4
    $region2: #{tpu_custom_call.1} parent=1 // loop_pre_header
      _
    $region3: #{tpu_custom_call.1} parent=1 // loop_header
      %s11 = sphi 0, %s15
      %p12 = scmp.ge.s32.totalorder %s11, 4
      %s18 = sphi 0, %s30
      %s19 = sphi 0, %s26
      %s20 = sphi 0, %s18
      %s21 = sphi 0, %s19
      %s22 = sphi 0, %s20
      %s23 = sphi 0, %s21
      %s33 = sphi 0, %s35
      %s36 = sphi 0, %s33
      %s37 = sphi 0, %s36
      %s53 = sphi 0, %s37
      %s59 = sphi 0, %s61
      %s62 = sphi 0, %s59
      %s63 = sphi 0, %s62
      %s79 = sphi 0, %s63
      %s87 = sphi 0, %s89
      %s90 = sphi 0, %s87
      %s91 = sphi 0, %s90
      %s107 = sphi 0, %s91
    $region4: #{tpu_custom_call.1} parent=1 // loop_header_branch
      %14 = sbr.rel (%p12) target = $region8
    $region5: #{tpu_custom_call.1} parent=1 // loop_body
      %s16 = ssub.s32 %s11, 1
      %s17 = ssub.s32 %s11, 2
      %s24 = sadd.s32 1, %s19
      %p25 = scmp.ge.s32.totalorder %s24, 1
      %s26 = scalar_select %p25, 0, %s24
      %s27 = sadd.s32 1, %s18
      %s28 = scalar_select %p25, %s27, %s18
      %p29 = scmp.ge.s32.totalorder %s28, 2
      %s30 = scalar_select %p29, 0, %s28
      %s31 = ssub.s32 %s19, %s26
      %p32 = scmp.eq.s32.totalorder %s31, 0
      %s34 = sadd.s32 %s33, 1
      %s35 = scalar_select %p32, %s33, %s34
      %p38 = pneg %p32
      %p39 = scmp.eq.s32.totalorder %s11, 1
      %p40 = por %p38, %p39
      %p41 = scmp.ne.s32.totalorder %s33, %s36
      %p42 = scmp.eq.s32.totalorder %s11, 0
      %p43 = por %p41, %p42
      %p44 = scmp.ne.s32.totalorder %s33, %s36
      %p45 = scmp.eq.s32.totalorder %s16, 1
      %p46 = por %p44, %p45
      %p47 = scmp.ne.s32.totalorder %s36, %s37
      %p48 = scmp.eq.s32.totalorder %s16, 0
      %p49 = por %p47, %p48
      %p50 = scmp.ne.s32.totalorder %s36, %s37
      %p51 = scmp.eq.s32.totalorder %s17, 1
      %p52 = por %p50, %p51
      %p54 = scmp.ne.s32.totalorder %s37, %s53
      %p55 = scmp.eq.s32.totalorder %s17, 0
      %p56 = por %p54, %p55
      %s57 = ssub.s32 %s18, %s30
      %p58 = scmp.eq.s32.totalorder %s57, 0
      %s60 = sadd.s32 %s59, 1
      %s61 = scalar_select %p58, %s59, %s60
      %p64 = pneg %p58
      %p65 = scmp.eq.s32.totalorder %s11, 1
      %p66 = por %p64, %p65
      %p67 = scmp.ne.s32.totalorder %s59, %s62
      %p68 = scmp.eq.s32.totalorder %s11, 0
      %p69 = por %p67, %p68
      %p70 = scmp.ne.s32.totalorder %s59, %s62
      %p71 = scmp.eq.s32.totalorder %s16, 1
      %p72 = por %p70, %p71
      %p73 = scmp.ne.s32.totalorder %s62, %s63
      %p74 = scmp.eq.s32.totalorder %s16, 0
      %p75 = por %p73, %p74
      %p76 = scmp.ne.s32.totalorder %s62, %s63
      %p77 = scmp.eq.s32.totalorder %s17, 1
      %p78 = por %p76, %p77
      %p80 = scmp.ne.s32.totalorder %s63, %s79
      %p81 = scmp.eq.s32.totalorder %s17, 0
      %p82 = por %p80, %p81
      %s83 = ssub.s32 %s19, %s26
      %s84 = ssub.s32 %s18, %s30
      %s85 = sor.u32 %s83, %s84
      %p86 = scmp.eq.s32.totalorder %s85, 0
      %s88 = sadd.s32 %s87, 1
      %s89 = scalar_select %p86, %s87, %s88
      %p92 = pneg %p86
      %p93 = scmp.eq.s32.totalorder %s11, 1
      %p94 = por %p92, %p93
      %p95 = scmp.ne.s32.totalorder %s87, %s90
      %p96 = scmp.eq.s32.totalorder %s11, 0
      %p97 = por %p95, %p96
      %p98 = scmp.ne.s32.totalorder %s87, %s90
      %p99 = scmp.eq.s32.totalorder %s16, 1
      %p100 = por %p98, %p99
      %p101 = scmp.ne.s32.totalorder %s90, %s91
      %p102 = scmp.eq.s32.totalorder %s16, 0
      %p103 = por %p101, %p102
      %p104 = scmp.ne.s32.totalorder %s90, %s91
      %p105 = scmp.eq.s32.totalorder %s17, 1
      %p106 = por %p104, %p105
      %p108 = scmp.ne.s32.totalorder %s91, %s107
      %p109 = scmp.eq.s32.totalorder %s17, 0
      %p110 = por %p108, %p109
      %p111 = scmp.le.s32.totalorder 1, %s11
      %p112 = scmp.lt.s32.totalorder %s11, 3
      %p113 = pnand %p111, %p112
      %p114 = pneg %p113
      // Predicated region
      $region9: #{tpu_custom_call.1} parent=5 // pred_check
        _
      $region10: #{tpu_custom_call.1} parent=5 // pred_check_branch
        %116 = sbr.rel (%p113) target = $region12
      $region11: #{tpu_custom_call.1} parent=5 // pred_region
        %s117 = ssub.s32 %s11, 1
        // Predicated region
        $region13: #{tpu_custom_call.1} parent=11 // pred_check
          %p118 = pneg %p49
        $region14: #{tpu_custom_call.1} parent=11 // pred_check_branch
          %120 = sbr.rel (%p118) target = $region16
        $region15: #{tpu_custom_call.1} parent=11 // pred_region
          %s121 = smul.u32 2, %s21
          %p122 = scmp.lt.s32.totalorder %s121, 1
          %s123 = scalar_select %p122, %s121, 1
          %s124 = smul.addr %s123, 8
          %s125 = scalar_lea.vmem %s0, %s124
          %s126 = smul.u32 2, %s21
        $region16: #{tpu_custom_call.1} parent=11 // pred_fallthru
          _
      $region12: #{tpu_custom_call.1} parent=5 // pred_fallthru
        _
      %p127 = scmp.lt.s32.totalorder %s11, 2
      // Predicated region
      $region17: #{tpu_custom_call.1} parent=5 // pred_check
        %p128 = pneg %p127
      $region18: #{tpu_custom_call.1} parent=5 // pred_check_branch
        %130 = sbr.rel (%p128) target = $region20
      $region19: #{tpu_custom_call.1} parent=5 // pred_region
        // Predicated region
        $region21: #{tpu_custom_call.1} parent=19 // pred_check
          %p131 = pneg %p69
        $region22: #{tpu_custom_call.1} parent=19 // pred_check_branch
          %133 = sbr.rel (%p131) target = $region24
        $region23: #{tpu_custom_call.1} parent=19 // pred_region
          %s134 = smul.u32 16, %s18
          %s135 = ssub.s32 25, %s134
          %p136 = scmp.lt.s32.totalorder %s135, 16
          %s137 = scalar_select %p136, %s135, 16
          %s138 = smul.u32 128, %s137
          %p139 = scmp.lt.s32.totalorder %s134, 24
          %s140 = scalar_select %p139, %s134, 24
          %s141 = smul.addr %s140, 8
          %s142 = scalar_lea.vmem %s1, %s141
          %s143 = smul.u32 16, %s18
          %s144 = ssub.s32 25, %s143
          %p145 = scmp.lt.s32.totalorder %s144, 16
          %s146 = scalar_select %p145, %s144, 16
          %s147 = smul.u32 128, %s146
        $region24: #{tpu_custom_call.1} parent=19 // pred_fallthru
          _
      $region20: #{tpu_custom_call.1} parent=5 // pred_fallthru
        _
      %p148 = scmp.le.s32.totalorder 1, %s11
      %p149 = scmp.lt.s32.totalorder %s11, 3
      %p150 = pnand %p148, %p149
      %p151 = pneg %p150
      // Predicated region
      $region25: #{tpu_custom_call.1} parent=5 // pred_check
        _
      $region26: #{tpu_custom_call.1} parent=5 // pred_check_branch
        %153 = sbr.rel (%p150) target = $region28
      $region27: #{tpu_custom_call.1} parent=5 // pred_region
        %s154 = ssub.s32 %s11, 1
        %s155 = smul.u32 2, %s21
        %p156 = scmp.lt.s32.totalorder %s155, 1
        %s157 = scalar_select %p156, %s155, 1
        %s158 = smul.addr %s157, 8
        %s159 = scalar_lea.vmem %s0, %s158
        %p160 = pneg %p49
        %p161 = pneg %p46
        %s162 = smul.u32 16, %s20
        %s163 = ssub.s32 25, %s162
        %p164 = scmp.lt.s32.totalorder %s163, 16
        %s165 = scalar_select %p164, %s163, 16
        %s166 = smul.u32 128, %s165
        %p167 = scmp.lt.s32.totalorder %s162, 24
        %s168 = scalar_select %p167, %s162, 24
        %s169 = smul.addr %s168, 8
        %s170 = scalar_lea.vmem %s1, %s169
        %p171 = pneg %p75
        %p172 = pneg %p72
        %p173 = pneg %p103
        %p174 = pneg %p100
        %s175 = sand.u32 %s90, 1
        %s176 = scalar_lea.sflag [#allocation3], %s175
        %s177 = sand.u32 %s90, 1
        %s178 = smul.addr %s177, 16
        %s179 = scalar_lea.vmem [#allocation2], %s178
        %s180 = smul.u32 2, %s21
        %p181 = scmp.lt.s32.totalorder %s180, 1
        %s182 = scalar_select %p181, %s180, 1
        %s183 = smul.addr %s182, 8
        %s184 = scalar_lea.vmem %s0, %s183
        %s185 = smul.u32 2, %s21
        %s186 = smul.u32 16, %s20
        %s187 = ssub.s32 25, %s186
        %p188 = scmp.lt.s32.totalorder %s187, 16
        %s189 = scalar_select %p188, %s187, 16
        %s190 = smul.u32 128, %s189
        %p191 = scmp.lt.s32.totalorder %s186, 24
        %s192 = scalar_select %p191, %s186, 24
        %s193 = smul.addr %s192, 8
        %s194 = scalar_lea.vmem %s1, %s193
        %s195 = smul.u32 16, %s20
        %s196 = ssub.s32 25, %s195
        %p197 = scmp.lt.s32.totalorder %s196, 16
        %s198 = scalar_select %p197, %s196, 16
        %s199 = smul.u32 128, %s198
        %s200 = smul.u32 2, %s21
        %v201 = vld [vmem:[%s184] sm:$0xff]
        %v202 = vld [vmem:[%s184 + $0x8] sm:$0xff]
        %v203 = vld [vmem:[%s194] sm:$0xff]
        %v204 = vld [vmem:[%s194 + $0x8] sm:$0xff]
        %v205 = vld [vmem:[%s194 + $0x10] sm:$0xff]
        %v206 = vld [vmem:[%s194 + $0x18] sm:$0xff]
        %v207 = vld [vmem:[%s194 + $0x20] sm:$0xff]
        %v208 = vld [vmem:[%s194 + $0x28] sm:$0xff]
        %v209 = vld [vmem:[%s194 + $0x30] sm:$0xff]
        %v210 = vld [vmem:[%s194 + $0x38] sm:$0xff]
        %v211 = vld [vmem:[%s194 + $0x40] sm:$0xff]
        %v212 = vld [vmem:[%s194 + $0x48] sm:$0xff]
        %v213 = vld [vmem:[%s194 + $0x50] sm:$0xff]
        %v214 = vld [vmem:[%s194 + $0x58] sm:$0xff]
        %v215 = vld [vmem:[%s194 + $0x60] sm:$0xff]
        %v216 = vld [vmem:[%s194 + $0x68] sm:$0xff]
        %v217 = vld [vmem:[%s194 + $0x70] sm:$0xff]
        %v218 = vld [vmem:[%s194 + $0x78] sm:$0xff]
        %vm219 = vcmask 261120
        %v221 = vsel %vm219, %v201, 0
        %v224 = vsel %vm219, %v202, 0
        %v227 = vsel %vm219, %v203, 0
        %v230 = vsel %vm219, %v204, 0
        %v233 = vsel %vm219, %v205, 0
        %v236 = vsel %vm219, %v206, 0
        %v239 = vsel %vm219, %v207, 0
        %v242 = vsel %vm219, %v208, 0
        %v245 = vsel %vm219, %v209, 0
        %v248 = vsel %vm219, %v210, 0
        %v251 = vsel %vm219, %v211, 0
        %v254 = vsel %vm219, %v212, 0
        %v257 = vsel %vm219, %v213, 0
        %v260 = vsel %vm219, %v214, 0
        %v263 = vsel %vm219, %v215, 0
        %v266 = vsel %vm219, %v216, 0
        %v269 = vsel %vm219, %v217, 0
        %v272 = vsel %vm219, %v218, 0
        %274 = vmatprep.subr.mxu0 0.0
        %275 = vmatpush1.xpose.msra.mxu0 %v227
        %276 = vmatprep.subr.mxu0 0.0
        %277 = vmatpush1.xpose.msra.mxu0 %v230
        %278 = vmatprep.subr.mxu0 0.0
        %279 = vmatpush1.xpose.msra.mxu0 %v233
        %280 = vmatprep.subr.mxu0 0.0
        %281 = vmatpush1.xpose.msra.mxu0 %v236
        %282 = vmatprep.subr.mxu0 0.0
        %283 = vmatpush1.xpose.msra.mxu0 %v239
        %284 = vmatprep.subr.mxu0 0.0
        %285 = vmatpush1.xpose.msra.mxu0 %v242
        %286 = vmatprep.subr.mxu0 0.0
        %287 = vmatpush1.xpose.msra.mxu0 %v245
        %288 = vmatprep.subr.mxu0 0.0
        %289 = vmatpush1.xpose.msra.mxu0 %v248
        %290 = vmatprep.subr.mxu0 0.0
        %291 = vmatpush1.xpose.msra.mxu0 %v251
        %292 = vmatprep.subr.mxu0 0.0
        %293 = vmatpush1.xpose.msra.mxu0 %v254
        %294 = vmatprep.subr.mxu0 0.0
        %295 = vmatpush1.xpose.msra.mxu0 %v257
        %296 = vmatprep.subr.mxu0 0.0
        %297 = vmatpush1.xpose.msra.mxu0 %v260
        %298 = vmatprep.subr.mxu0 0.0
        %299 = vmatpush1.xpose.msra.mxu0 %v263
        %300 = vmatprep.subr.mxu0 0.0
        %301 = vmatpush1.xpose.msra.mxu0 %v266
        %302 = vmatprep.subr.mxu0 0.0
        %303 = vmatpush1.xpose.msra.mxu0 %v269
        %304 = vmatprep.subr.mxu0 0.0
        %305 = vmatpush1.xpose.msra.mxu0 %v272
        %306 = vmatprep.subr.mxu0 0.0
        %307 = vmatpush1.xpose.msra.mxu0 0.0
        %308 = vmatprep.subr.mxu0 0.0
        %309 = vmatpush1.xpose.msra.mxu0 0.0
        %310 = vmatprep.subr.mxu0 0.0
        %311 = vmatpush1.xpose.msra.mxu0 0.0
        %312 = vmatprep.subr.mxu0 0.0
        %313 = vmatpush1.xpose.msra.mxu0 0.0
        %314 = vmatprep.subr.mxu0 0.0
        %315 = vmatpush1.xpose.msra.mxu0 0.0
        %316 = vmatprep.subr.mxu0 0.0
        %317 = vmatpush1.xpose.msra.mxu0 0.0
        %318 = vmatprep.subr.mxu0 0.0
        %319 = vmatpush1.xpose.msra.mxu0 0.0
        %320 = vmatprep.subr.mxu0 0.0
        %321 = vmatpush1.xpose.msra.mxu0 0.0
        %322 = vmatprep.subr.mxu0 0.0
        %323 = vmatpush1.xpose.msra.mxu0 0.0
        %324 = vmatprep.subr.mxu0 0.0
        %325 = vmatpush1.xpose.msra.mxu0 0.0
        %326 = vmatprep.subr.mxu0 0.0
        %327 = vmatpush1.xpose.msra.mxu0 0.0
        %328 = vmatprep.subr.mxu0 0.0
        %329 = vmatpush1.xpose.msra.mxu0 0.0
        %330 = vmatprep.subr.mxu0 0.0
        %331 = vmatpush1.xpose.msra.mxu0 0.0
        %332 = vmatprep.subr.mxu0 0.0
        %333 = vmatpush1.xpose.msra.mxu0 0.0
        %334 = vmatprep.subr.mxu0 0.0
        %335 = vmatpush1.xpose.msra.mxu0 0.0
        %336 = vmatprep.subr.mxu0 0.0
        %337 = vmatpush1.xpose.msra.mxu0 0.0
        %338 = vmatprep.mubr.f32.mxu0 0.0
        %339 = vmatmul.mubr.f32.gmra.mrb[0].mxu0 %v221
        %v340 = vpop.f32.mrb[0].mxu0
        %v341 = vadd.f32 0.0, %v340
        %v342 = vpop.f32.mrb[0].mxu0
        %343 = vmatprep.mubr.f32.mxu0 0.0
        %344 = vmatmul.mubr.f32.gmra.mrb[0].mxu0 %v224
        %v345 = vpop.f32.mrb[0].mxu0
        %v346 = vadd.f32 0.0, %v345
        %v347 = vpop.f32.mrb[0].mxu0
        %348 = vdwg.mxu0
        %349 = vst [vmem:[%s179] sm:$0xff] %v341
        %350 = vst [vmem:[%s179 + $0x8] sm:$0xff] %v346
        %s351 = sand.u32 %s90, 1
        %s352 = scalar_lea.sflag [#allocation3], %s351
        %s353 = sand.u32 %s90, 1
        %s354 = smul.addr %s353, 16
        %s355 = scalar_lea.vmem [#allocation2], %s354
        // Predicated region
        $region29: #{tpu_custom_call.1} parent=27 // pred_check
          %p356 = pneg %p100
        $region30: #{tpu_custom_call.1} parent=27 // pred_check_branch
          %358 = sbr.rel (%p356) target = $region32
        $region31: #{tpu_custom_call.1} parent=27 // pred_region
          %s359 = smul.u32 2, %s21
          %s361 = ssub.s32 256, 256
          %362 = vsyncadd %s352, %s361
          %s363 = smul.addr %s359, 2
          %s364 = sadd.s32 %s20, %s363
          %s365 = smul.addr %s364, 128
          %s366 = scalar_lea.hbm %s2, %s365
          %s367 = sshll.u32 %s355, 4
          %s368 = int_to_ptr.vmem [resolvable:$true] %s367
          %373 = dma.vmem_to_hbm [thread:$0]  %s368, 256, %s366, %s352, 128, 256, 8
        $region32: #{tpu_custom_call.1} parent=27 // pred_fallthru
          _
      $region28: #{tpu_custom_call.1} parent=5 // pred_fallthru
        _
      %p374 = scmp.le.s32.totalorder 2, %s11
      // Predicated region
      $region33: #{tpu_custom_call.1} parent=5 // pred_check
        %p375 = pneg %p374
      $region34: #{tpu_custom_call.1} parent=5 // pred_check_branch
        %377 = sbr.rel (%p375) target = $region36
      $region35: #{tpu_custom_call.1} parent=5 // pred_region
        %s378 = ssub.s32 %s11, 2
        // Predicated region
        $region37: #{tpu_custom_call.1} parent=35 // pred_check
          %p379 = pneg %p106
        $region38: #{tpu_custom_call.1} parent=35 // pred_check_branch
          %381 = sbr.rel (%p379) target = $region40
        $region39: #{tpu_custom_call.1} parent=35 // pred_region
          %s382 = sand.u32 %s91, 1
          %s383 = scalar_lea.sflag [#allocation3], %s382
          %s384 = sand.u32 %s91, 1
          %s385 = smul.addr %s384, 16
          %s386 = scalar_lea.vmem [#allocation2], %s385
          %387 = dma.done %s383, 256
        $region40: #{tpu_custom_call.1} parent=35 // pred_fallthru
          _
      $region36: #{tpu_custom_call.1} parent=5 // pred_fallthru
        _
    $region6: #{tpu_custom_call.1} parent=1 // loop_footer
      %s15 = sadd.s32 1, %s11
    $region7: #{tpu_custom_call.1} parent=1 // loop_footer_branch
      %10 = sbr.rel target = $region3
    $region8: #{tpu_custom_call.1} parent=1 // loop_exit
      _
    %388 = vsyncpa [#allocation3], 1
    %s389 = scalar_lea.sflag [#allocation3], 1
    %390 = vsyncpa %s389, 1

</llo_original>
